<compile_context>
chip_gen: v7x
topology: tpu7x:2x2x1
jax: 0.10.0
libtpu: 0.0.40
codegen_flags: <defaults>
</compile_context>

<pallas_src>
import functools
import math

import jax
import jax.numpy as jnp
from jax import lax
from jax.experimental import pallas as pl
from jax.experimental.pallas import tpu as pltpu


def _dice_sums_kernel(l_ref, t_ref, inter_ref, denom_ref, *, S, T, C, need_mask):
    """Accumulate per-(n, c)  sum(l * onehot)  and  sum(l) + count(onehot)."""
    k = pl.program_id(1)

    @pl.when(k == 0)
    def _():
        inter_ref[...] = jnp.zeros_like(inter_ref)
        denom_ref[...] = jnp.zeros_like(denom_ref)

    l = l_ref[...].astype(jnp.float32)                     # (1, C, T), widen in-kernel
    t = t_ref[...]                                         # (1, 1, T) int32 labels

    # Per-tile one-hot: integer labels vs. class iota (sublane-broadcast compare).
    cls = lax.broadcasted_iota(jnp.int32, (1, C, T), 1)
    oh = (t == cls).astype(jnp.float32)                    # (1, C, T)

    if need_mask:
        # Ragged spatial tail: zero out lanes past the true spatial extent S.
        lane = lax.broadcasted_iota(jnp.int32, (1, 1, T), 2)
        valid = (k * T + lane) < S
        l = jnp.where(valid, l, 0.0)
        oh = jnp.where(valid, oh, 0.0)

    # sum(l + onehot) == sum(l) + count(onehot): avoids one full-tile temporary.
    inter_ref[...] += jnp.sum(l * oh, axis=-1, keepdims=True)
    denom_ref[...] += (jnp.sum(l, axis=-1, keepdims=True) +
                       jnp.sum(oh, axis=-1, keepdims=True))


def _pick_spatial_tile(S, C, elem_bytes, max_tile=1 << 17):
    """Aim for ~2 MiB of HBM traffic per grid step (amortize ~0.35us/step fixed
    cost) while keeping double-buffered inputs + compiler temporaries well under
    the 32 MiB scoped-VMEM budget used below."""
    bytes_per_lane = C * elem_bytes + 4              # logits + int32 label per voxel
    t = (2 * 1024 * 1024) // bytes_per_lane
    t = max(512, min(int(t), max_tile))
    return (t // 128) * 128


def _dice_sums(logits3d, targets3d, *, tile_s=None):
    """logits3d: (N, C, S) native dtype; targets3d: (N, 1, S) int32.
    Returns (inter, denom), each (N, C) float32."""
    N, C, S = logits3d.shape
    elem_bytes = jnp.dtype(logits3d.dtype).itemsize

    if S < 128:
        # Tiny spatial extent: pad to one full lane tile (cheap; sum-neutral:
        # padded logits are 0 and padded labels (=C) match no class).
        pad = 128 - S
        logits3d = jnp.pad(logits3d, ((0, 0), (0, 0), (0, pad)))
        targets3d = jnp.pad(targets3d, ((0, 0), (0, 0), (0, pad)), constant_values=C)
        S = 128

    if tile_s is None:
        tile_s = _pick_spatial_tile(S, C, elem_bytes)
    tile_s = max(128, (int(tile_s) // 128) * 128)

    # Block lane width must be a multiple of 128 (or the full extent S).
    T = min(tile_s, S if S % 128 == 0 else (S // 128) * 128)
    K = -(-S // T)
    need_mask = (S % T) != 0

    kernel = functools.partial(_dice_sums_kernel, S=S, T=T, C=C, need_mask=need_mask)

    out_i, out_d = pl.pallas_call(
        kernel,
        out_shape=(jax.ShapeDtypeStruct((N, C, 1), jnp.float32),
                   jax.ShapeDtypeStruct((N, C, 1), jnp.float32)),
        grid_spec=pltpu.PrefetchScalarGridSpec(
            num_scalar_prefetch=0,
            grid=(N, K),
            in_specs=[pl.BlockSpec((1, C, T), lambda n, k: (n, 0, k)),
                      pl.BlockSpec((1, 1, T), lambda n, k: (n, 0, k))],
            out_specs=[pl.BlockSpec((1, C, 1), lambda n, k: (n, 0, 0)),
                       pl.BlockSpec((1, C, 1), lambda n, k: (n, 0, 0))]),
        compiler_params=pltpu.CompilerParams(
            dimension_semantics=("parallel", "arbitrary"),
            vmem_limit_bytes=32 * 1024 * 1024),
        cost_estimate=pl.CostEstimate(
            flops=int(5 * N * C * S),
            transcendentals=0,
            bytes_accessed=int(N * C * S * elem_bytes + N * S * 4 + 2 * N * C * 4)),
    )(logits3d, targets3d)

    return out_i[:, :, 0], out_d[:, :, 0]


def dice_loss(logits, targets, labels, ignore_idx=None, epsilon=1e-5, tile_s=None):
    """JAX/Pallas equivalent of DiceLoss.forward.

    logits:  (N, C, D, H, W) float (any float dtype; accumulated in f32)
    targets: (N, D, H, W) integer class labels in [0, len(labels))
    """
    if isinstance(ignore_idx, int):
        ignore_idx = [ignore_idx]
    C = len(labels)
    N = logits.shape[0]
    assert logits.shape[1] == C
    S = math.prod(logits.shape[2:])

    logits3d = logits.reshape(N, C, S)                      # native dtype, free reshape
    targets3d = targets.reshape(N, 1, S).astype(jnp.int32)  # int labels only (no one-hot)

    # Hot path: per-(n, c) spatial reductions in the Pallas kernel.
    inter, denom = _dice_sums(logits3d, targets3d, tile_s=tile_s)

    dice = 2.0 * inter / (denom + epsilon)                  # (N, C)
    per_channel = jnp.mean(1.0 - dice, axis=0)              # mean over batch, per channel

    if ignore_idx:
        keep = jnp.array([i not in ignore_idx for i in range(C)], dtype=bool)
        count = jnp.sum(keep.astype(jnp.float32))
        tot = jnp.sum(jnp.where(keep, per_channel, 0.0))
    else:
        count = jnp.float32(C)
        tot = jnp.sum(per_channel)
    return tot / count


def _dice_loss_ref(logits, targets, labels, ignore_idx=None, epsilon=1e-5):
    """Pure-jnp reference mirroring the PyTorch loop exactly."""
    if isinstance(ignore_idx, int):
        ignore_idx = [ignore_idx]
    C = len(labels)
    N = logits.shape[0]
    one_hot = (targets[:, None] == jnp.arange(C)[None, :, None, None, None]
               ).astype(jnp.float32)
    tot, count = 0.0, 0
    for i in range(C):
        use = (ignore_idx and i not in ignore_idx) or (not ignore_idx)
        if not use:
            continue
        l = logits[:, i].reshape(N, -1).astype(jnp.float32)
        t = one_hot[:, i].reshape(N, -1)
        inter = (l * t).sum(-1)
        dice = 2.0 * inter / ((l + t).sum(-1) + epsilon)
        tot += jnp.mean(1.0 - dice)
        count += 1
    return tot / count


if __name__ == "__main__":
    labels = [0, 1, 2, 3]                  # deterministic "config" stand-in
    N, C, D, H, W = 2, 4, 5, 8, 8          # S = 320: not a multiple of 256/128*2

    key = jax.random.PRNGKey(0)
    k_logit, k_tgt = jax.random.split(key)
    logits = jax.random.normal(k_logit, (N, C, D, H, W), dtype=jnp.float32)
    targets = jax.random.randint(k_tgt, (N, D, H, W), 0, C, dtype=jnp.int32)

    ref = _dice_loss_ref(logits, targets, labels, ignore_idx=None, epsilon=1e-5)

    # 1) auto-sized tile (single spatial step at this small size)
    loss = dice_loss(logits, targets, labels, ignore_idx=None, epsilon=1e-5)
    loss = jax.block_until_ready(loss)
    assert jnp.allclose(loss, ref, rtol=1e-5, atol=1e-5), (loss, ref)

    # 2) forced small tile: exercises multi-step accumulation + ragged-tail masking
    loss_small = dice_loss(logits, targets, labels, ignore_idx=None,
                           epsilon=1e-5, tile_s=128)
    loss_small = jax.block_until_ready(loss_small)
    assert jnp.allclose(loss_small, ref, rtol=1e-5, atol=1e-5), (loss_small, ref)

    # 3) ignore_idx path
    ref_ign = _dice_loss_ref(logits, targets, labels, ignore_idx=[0], epsilon=1e-5)
    loss_ign = dice_loss(logits, targets, labels, ignore_idx=[0], epsilon=1e-5,
                         tile_s=256)
    loss_ign = jax.block_until_ready(loss_ign)
    assert jnp.allclose(loss_ign, ref_ign, rtol=1e-5, atol=1e-5), (loss_ign, ref_ign)

    print("KERNEL_OK")
</pallas_src>

<mosaic_0001>
module attributes {stable_mosaic.version = 11 : i64} {
  func.func @_dice_sums_kernel(%arg0: i32, %arg1: i32, %arg2: memref<1x4x256xf32, #tpu.memory_space<vmem>>, %arg3: memref<1x1x256xi32, #tpu.memory_space<vmem>>, %arg4: memref<1x4x1xf32, #tpu.memory_space<vmem>>, %arg5: memref<1x4x1xf32, #tpu.memory_space<vmem>>) attributes {dimension_semantics = [#tpu.dimension_semantics<parallel>, #tpu.dimension_semantics<arbitrary>], iteration_bounds = array<i64: 2, 2>, scalar_prefetch = 0 : i64, scratch_operands = 0 : i64, tpu.core_type = #tpu.core_type<tc>, window_params = [{transform_indices = @transform_0, window_bounds = array<i64: 1, 4, 256>}, {transform_indices = @transform_1, window_bounds = array<i64: 1, 1, 256>}, {transform_indices = @transform_2, window_bounds = array<i64: 1, 4, 1>}, {transform_indices = @transform_3, window_bounds = array<i64: 1, 4, 1>}]} {
    %c0_i32 = arith.constant 0 : i32
    %0 = arith.cmpi eq, %arg1, %c0_i32 : i32
    %1 = arith.extui %0 : i1 to i32
    %c0_i32_0 = arith.constant 0 : i32
    %2 = arith.cmpi ne, %1, %c0_i32_0 : i32
    scf.if %2 {
      %cst_22 = arith.constant 0.000000e+00 : f32
      %38 = vector.broadcast %cst_22 : f32 to vector<1x4x1xf32>
      %c0_23 = arith.constant 0 : index
      %c0_24 = arith.constant 0 : index
      %c0_25 = arith.constant 0 : index
      %39 = vector.load %arg4[%c0_23, %c0_24, %c0_25] : memref<1x4x1xf32, #tpu.memory_space<vmem>>, vector<1x4x1xf32>
      tpu.vector_store %arg4[%c0_23, %c0_24, %c0_25], %38 {strides = array<i32>} : memref<1x4x1xf32, #tpu.memory_space<vmem>>, vector<1x4x1xf32>,
      %cst_26 = arith.constant 0.000000e+00 : f32
      %40 = vector.broadcast %cst_26 : f32 to vector<1x4x1xf32>
      %c0_27 = arith.constant 0 : index
      %c0_28 = arith.constant 0 : index
      %c0_29 = arith.constant 0 : index
      %41 = vector.load %arg5[%c0_27, %c0_28, %c0_29] : memref<1x4x1xf32, #tpu.memory_space<vmem>>, vector<1x4x1xf32>
      tpu.vector_store %arg5[%c0_27, %c0_28, %c0_29], %40 {strides = array<i32>} : memref<1x4x1xf32, #tpu.memory_space<vmem>>, vector<1x4x1xf32>,
    } else {
    }
    %c0 = arith.constant 0 : index
    %c0_1 = arith.constant 0 : index
    %c0_2 = arith.constant 0 : index
    %3 = vector.load %arg2[%c0, %c0_1, %c0_2] : memref<1x4x256xf32, #tpu.memory_space<vmem>>, vector<1x4x256xf32>
    %c0_3 = arith.constant 0 : index
    %c0_4 = arith.constant 0 : index
    %c0_5 = arith.constant 0 : index
    %4 = vector.load %arg3[%c0_3, %c0_4, %c0_5] : memref<1x1x256xi32, #tpu.memory_space<vmem>>, vector<1x1x256xi32>
    %5 = tpu.iota {dimensions = array<i32: 1>} : vector<1x4x256xi32>
    %6 = vector.broadcast %4 : vector<1x1x256xi32> to vector<1x4x256xi32>
    %7 = arith.cmpi eq, %6, %5 : vector<1x4x256xi32>
    %8 = arith.extui %7 : vector<1x4x256xi1> to vector<1x4x256xi32>
    %9 = arith.sitofp %8 : vector<1x4x256xi32> to vector<1x4x256xf32>
    %10 = tpu.iota {dimensions = array<i32: 2>} : vector<1x1x256xi32>
    %c256_i32 = arith.constant 256 : i32
    %11 = arith.muli %arg1, %c256_i32 : i32
    %12 = vector.broadcast %11 : i32 to vector<1x1x256xi32>
    %13 = arith.addi %12, %10 : vector<1x1x256xi32>
    %c320_i32 = arith.constant 320 : i32
    %14 = vector.broadcast %c320_i32 : i32 to vector<1x1x256xi32>
    %15 = arith.cmpi slt, %13, %14 : vector<1x1x256xi32>
    %cst = arith.constant 0.000000e+00 : f32
    %16 = vector.shape_cast %15 : vector<1x1x256xi1> to vector<1x1x256xi1>
    %17 = vector.broadcast %16 : vector<1x1x256xi1> to vector<1x4x256xi1>
    %18 = vector.broadcast %cst : f32 to vector<1x4x256xf32>
    %19 = arith.select %17, %3, %18 : vector<1x4x256xi1>, vector<1x4x256xf32>
    %cst_6 = arith.constant 0.000000e+00 : f32
    %20 = vector.shape_cast %15 : vector<1x1x256xi1> to vector<1x1x256xi1>
    %21 = vector.broadcast %20 : vector<1x1x256xi1> to vector<1x4x256xi1>
    %22 = vector.broadcast %cst_6 : f32 to vector<1x4x256xf32>
    %23 = arith.select %21, %9, %22 : vector<1x4x256xi1>, vector<1x4x256xf32>
    %c0_7 = arith.constant 0 : index
    %c0_8 = arith.constant 0 : index
    %c0_9 = arith.constant 0 : index
    %24 = vector.load %arg4[%c0_7, %c0_8, %c0_9] : memref<1x4x1xf32, #tpu.memory_space<vmem>>, vector<1x4x1xf32>
    %25 = arith.mulf %19, %23 : vector<1x4x256xf32>
    %cst_10 = arith.constant dense<0.000000e+00> : vector<1x4xf32>
    %26 = vector.multi_reduction <add>, %25, %cst_10 [2] : vector<1x4x256xf32> to vector<1x4xf32>
    %27 = vector.shape_cast %26 : vector<1x4xf32> to vector<1x4x1xf32>
    %28 = arith.addf %24, %27 : vector<1x4x1xf32>
    %c0_11 = arith.constant 0 : index
    %c0_12 = arith.constant 0 : index
    %c0_13 = arith.constant 0 : index
    %29 = vector.load %arg4[%c0_11, %c0_12, %c0_13] : memref<1x4x1xf32, #tpu.memory_space<vmem>>, vector<1x4x1xf32>
    tpu.vector_store %arg4[%c0_11, %c0_12, %c0_13], %28 {strides = array<i32>} : memref<1x4x1xf32, #tpu.memory_space<vmem>>, vector<1x4x1xf32>,
    %c0_14 = arith.constant 0 : index
    %c0_15 = arith.constant 0 : index
    %c0_16 = arith.constant 0 : index
    %30 = vector.load %arg5[%c0_14, %c0_15, %c0_16] : memref<1x4x1xf32, #tpu.memory_space<vmem>>, vector<1x4x1xf32>
    %cst_17 = arith.constant dense<0.000000e+00> : vector<1x4xf32>
    %31 = vector.multi_reduction <add>, %19, %cst_17 [2] : vector<1x4x256xf32> to vector<1x4xf32>
    %32 = vector.shape_cast %31 : vector<1x4xf32> to vector<1x4x1xf32>
    %cst_18 = arith.constant dense<0.000000e+00> : vector<1x4xf32>
    %33 = vector.multi_reduction <add>, %23, %cst_18 [2] : vector<1x4x256xf32> to vector<1x4xf32>
    %34 = vector.shape_cast %33 : vector<1x4xf32> to vector<1x4x1xf32>
    %35 = arith.addf %32, %34 : vector<1x4x1xf32>
    %36 = arith.addf %30, %35 : vector<1x4x1xf32>
    %c0_19 = arith.constant 0 : index
    %c0_20 = arith.constant 0 : index
    %c0_21 = arith.constant 0 : index
    %37 = vector.load %arg5[%c0_19, %c0_20, %c0_21] : memref<1x4x1xf32, #tpu.memory_space<vmem>>, vector<1x4x1xf32>
    tpu.vector_store %arg5[%c0_19, %c0_20, %c0_21], %36 {strides = array<i32>} : memref<1x4x1xf32, #tpu.memory_space<vmem>>, vector<1x4x1xf32>,
    return
  }
  func.func @transform_0(%arg0: i32, %arg1: i32) -> (i32, i32, i32) {
    %c0_i32 = arith.constant 0 : i32
    %c0_i32_0 = arith.constant 0 : i32
    return %arg0, %c0_i32, %arg1 : i32, i32, i32
  }
  func.func @transform_1(%arg0: i32, %arg1: i32) -> (i32, i32, i32) {
    %c0_i32 = arith.constant 0 : i32
    %c0_i32_0 = arith.constant 0 : i32
    return %arg0, %c0_i32, %arg1 : i32, i32, i32
  }
  func.func @transform_2(%arg0: i32, %arg1: i32) -> (i32, i32, i32) {
    %c0_i32 = arith.constant 0 : i32
    %c0_i32_0 = arith.constant 0 : i32
    %c0_i32_1 = arith.constant 0 : i32
    return %arg0, %c0_i32, %c0_i32_0 : i32, i32, i32
  }
  func.func @transform_3(%arg0: i32, %arg1: i32) -> (i32, i32, i32) {
    %c0_i32 = arith.constant 0 : i32
    %c0_i32_0 = arith.constant 0 : i32
    %c0_i32_1 = arith.constant 0 : i32
    return %arg0, %c0_i32, %c0_i32_0 : i32, i32, i32
  }
}

</mosaic_0001>

<llo_original>
// kernel: tpu_custom_call.1
$region0: #{tpu_custom_call.1}
  #allocation0 [shape = 'u32[]', space=smem, size = 0x4, offset = 0x4, fixed_abs, tag = 'smem constant byte address 0x4 - core index']
  #allocation1 [shape = 'u32[144,128]{1,0:T(1,128)}', space=vmem, size = 0x12000, scoped, tag = 'internal scratch']
  %s0 = inlined_call_operand.hbm [shape: f32[2,4,320], index: 0, kind: input, shape index: {}]
  %s1 = inlined_call_operand.hbm [shape: s32[2,1,320], index: 1, kind: input, shape index: {}]
  %s2 = inlined_call_operand.vmem [shape: f32[2,4,1], index: 2, kind: output, shape index: {0}]
  %s3 = inlined_call_operand.vmem [shape: f32[2,4,1], index: 3, kind: output, shape index: {1}]
  %4 = xla_tuple %s2, %s3
  %s5 = sld [smem:[#allocation0]]
  $region61: #{tpu_custom_call.1} parent=0
    _
  %s7 = ssub.s32 1, %s5
  %s8 = scalar_select 0, %s7, %s5
  $region1: #{tpu_custom_call.1} parent=0
    #allocation2 [shape = 'u8[8192]{0}', space=vmem, size = 0x2000, scoped, tag = 'input window, operand 0']
    #allocation3 [shape = 's32[2]{0}', space=sflag, size = 0x8, scoped, tag = 'scoped memory for tpu_custom_call.1']
    #allocation4 [shape = 'u8[2048]{0}', space=vmem, size = 0x800, scoped, tag = 'input window, operand 1']
    #allocation5 [shape = 's32[2]{0}', space=sflag, size = 0x8, scoped, tag = 'scoped memory for tpu_custom_call.1']
    %9 = vsyncpa [#allocation3], 0
    %s10 = scalar_lea.sflag [#allocation3], 1
    %11 = vsyncpa %s10, 0
    %12 = vsyncpa [#allocation5], 0
    %s13 = scalar_lea.sflag [#allocation5], 1
    %14 = vsyncpa %s13, 0
    loop: start=0, step=1, limit=6
    $region2: #{tpu_custom_call.1} parent=1 // loop_pre_header
      _
    $region3: #{tpu_custom_call.1} parent=1 // loop_header
      %s16 = sphi 0, %s20
      %p17 = scmp.ge.s32.totalorder %s16, 6
      %s23 = sphi 0, %s35
      %s24 = sphi 0, %s31
      %s25 = sphi 0, %s23
      %s26 = sphi 0, %s24
      %s27 = sphi 0, %s25
      %s28 = sphi 0, %s26
      %s40 = sphi 0, %s42
      %s43 = sphi 0, %s40
      %s44 = sphi 0, %s43
      %s60 = sphi 0, %s44
      %s68 = sphi 0, %s70
      %s71 = sphi 0, %s68
      %s72 = sphi 0, %s71
      %s88 = sphi 0, %s72
      %s94 = sphi 0, %s96
      %s97 = sphi 0, %s94
      %s98 = sphi 0, %s97
      %s114 = sphi 0, %s98
      %s120 = sphi 0, %s122
      %s123 = sphi 0, %s120
      %s124 = sphi 0, %s123
      %s140 = sphi 0, %s124
    $region4: #{tpu_custom_call.1} parent=1 // loop_header_branch
      %19 = sbr.rel (%p17) target = $region8
    $region5: #{tpu_custom_call.1} parent=1 // loop_body
      %s21 = ssub.s32 %s16, 1
      %s22 = ssub.s32 %s16, 2
      %s29 = sadd.s32 1, %s24
      %p30 = scmp.ge.s32.totalorder %s29, 2
      %s31 = scalar_select %p30, 0, %s29
      %s32 = sadd.s32 1, %s23
      %s33 = scalar_select %p30, %s32, %s23
      %p34 = scmp.ge.s32.totalorder %s33, 2
      %s35 = scalar_select %p34, 0, %s33
      %s36 = ssub.s32 %s23, %s35
      %s37 = ssub.s32 %s24, %s31
      %s38 = sor.u32 %s36, %s37
      %p39 = scmp.eq.s32.totalorder %s38, 0
      %s41 = sadd.s32 %s40, 1
      %s42 = scalar_select %p39, %s40, %s41
      %p45 = pneg %p39
      %p46 = scmp.eq.s32.totalorder %s16, 3
      %p47 = por %p45, %p46
      %p48 = scmp.ne.s32.totalorder %s40, %s43
      %p49 = scmp.eq.s32.totalorder %s16, 0
      %p50 = por %p48, %p49
      %p51 = scmp.ne.s32.totalorder %s40, %s43
      %p52 = scmp.eq.s32.totalorder %s21, 3
      %p53 = por %p51, %p52
      %p54 = scmp.ne.s32.totalorder %s43, %s44
      %p55 = scmp.eq.s32.totalorder %s21, 0
      %p56 = por %p54, %p55
      %p57 = scmp.ne.s32.totalorder %s43, %s44
      %p58 = scmp.eq.s32.totalorder %s22, 3
      %p59 = por %p57, %p58
      %p61 = scmp.ne.s32.totalorder %s44, %s60
      %p62 = scmp.eq.s32.totalorder %s22, 0
      %p63 = por %p61, %p62
      %s64 = ssub.s32 %s23, %s35
      %s65 = ssub.s32 %s24, %s31
      %s66 = sor.u32 %s64, %s65
      %p67 = scmp.eq.s32.totalorder %s66, 0
      %s69 = sadd.s32 %s68, 1
      %s70 = scalar_select %p67, %s68, %s69
      %p73 = pneg %p67
      %p74 = scmp.eq.s32.totalorder %s16, 3
      %p75 = por %p73, %p74
      %p76 = scmp.ne.s32.totalorder %s68, %s71
      %p77 = scmp.eq.s32.totalorder %s16, 0
      %p78 = por %p76, %p77
      %p79 = scmp.ne.s32.totalorder %s68, %s71
      %p80 = scmp.eq.s32.totalorder %s21, 3
      %p81 = por %p79, %p80
      %p82 = scmp.ne.s32.totalorder %s71, %s72
      %p83 = scmp.eq.s32.totalorder %s21, 0
      %p84 = por %p82, %p83
      %p85 = scmp.ne.s32.totalorder %s71, %s72
      %p86 = scmp.eq.s32.totalorder %s22, 3
      %p87 = por %p85, %p86
      %p89 = scmp.ne.s32.totalorder %s72, %s88
      %p90 = scmp.eq.s32.totalorder %s22, 0
      %p91 = por %p89, %p90
      %s92 = ssub.s32 %s23, %s35
      %p93 = scmp.eq.s32.totalorder %s92, 0
      %s95 = sadd.s32 %s94, 1
      %s96 = scalar_select %p93, %s94, %s95
      %p99 = pneg %p93
      %p100 = scmp.eq.s32.totalorder %s16, 3
      %p101 = por %p99, %p100
      %p102 = scmp.ne.s32.totalorder %s94, %s97
      %p103 = scmp.eq.s32.totalorder %s16, 0
      %p104 = por %p102, %p103
      %p105 = scmp.ne.s32.totalorder %s94, %s97
      %p106 = scmp.eq.s32.totalorder %s21, 3
      %p107 = por %p105, %p106
      %p108 = scmp.ne.s32.totalorder %s97, %s98
      %p109 = scmp.eq.s32.totalorder %s21, 0
      %p110 = por %p108, %p109
      %p111 = scmp.ne.s32.totalorder %s97, %s98
      %p112 = scmp.eq.s32.totalorder %s22, 3
      %p113 = por %p111, %p112
      %p115 = scmp.ne.s32.totalorder %s98, %s114
      %p116 = scmp.eq.s32.totalorder %s22, 0
      %p117 = por %p115, %p116
      %s118 = ssub.s32 %s23, %s35
      %p119 = scmp.eq.s32.totalorder %s118, 0
      %s121 = sadd.s32 %s120, 1
      %s122 = scalar_select %p119, %s120, %s121
      %p125 = pneg %p119
      %p126 = scmp.eq.s32.totalorder %s16, 3
      %p127 = por %p125, %p126
      %p128 = scmp.ne.s32.totalorder %s120, %s123
      %p129 = scmp.eq.s32.totalorder %s16, 0
      %p130 = por %p128, %p129
      %p131 = scmp.ne.s32.totalorder %s120, %s123
      %p132 = scmp.eq.s32.totalorder %s21, 3
      %p133 = por %p131, %p132
      %p134 = scmp.ne.s32.totalorder %s123, %s124
      %p135 = scmp.eq.s32.totalorder %s21, 0
      %p136 = por %p134, %p135
      %p137 = scmp.ne.s32.totalorder %s123, %s124
      %p138 = scmp.eq.s32.totalorder %s22, 3
      %p139 = por %p137, %p138
      %p141 = scmp.ne.s32.totalorder %s124, %s140
      %p142 = scmp.eq.s32.totalorder %s22, 0
      %p143 = por %p141, %p142
      %p144 = scmp.le.s32.totalorder 1, %s16
      %p145 = scmp.lt.s32.totalorder %s16, 5
      %p146 = pnand %p144, %p145
      %p147 = pneg %p146
      // Predicated region
      $region9: #{tpu_custom_call.1} parent=5 // pred_check
        _
      $region10: #{tpu_custom_call.1} parent=5 // pred_check_branch
        %149 = sbr.rel (%p146) target = $region12
      $region11: #{tpu_custom_call.1} parent=5 // pred_region
        %s150 = ssub.s32 %s16, 1
      $region12: #{tpu_custom_call.1} parent=5 // pred_fallthru
        _
      %p151 = scmp.lt.s32.totalorder %s16, 4
      // Predicated region
      $region13: #{tpu_custom_call.1} parent=5 // pred_check
        %p152 = pneg %p151
      $region14: #{tpu_custom_call.1} parent=5 // pred_check_branch
        %154 = sbr.rel (%p152) target = $region16
      $region15: #{tpu_custom_call.1} parent=5 // pred_region
        // Predicated region
        $region17: #{tpu_custom_call.1} parent=15 // pred_check
          %p155 = pneg %p50
        $region18: #{tpu_custom_call.1} parent=15 // pred_check_branch
          %157 = sbr.rel (%p155) target = $region20
        $region19: #{tpu_custom_call.1} parent=15 // pred_region
          %s158 = sand.u32 %s40, 1
          %s159 = scalar_lea.sflag [#allocation3], %s158
          %s160 = sand.u32 %s40, 1
          %s161 = smul.addr %s160, 8
          %s162 = scalar_lea.vmem [#allocation2], %s161
          %s163 = smul.u32 2, %s24
          %s164 = ssub.s32 3, %s163
          %p165 = scmp.lt.s32.totalorder %s164, 2
          %s166 = scalar_select %p165, %s164, 2
          %s167 = smul.u32 64, %s166
          %s169 = ssub.s32 128, %s167
          %170 = vsyncadd %s159, %s169
          %p171 = scmp.ne.s32.totalorder 0, %s167
          %s172 = smul.addr %s23, 3
          %s173 = sadd.s32 %s163, %s172
          %s174 = smul.addr %s173, 64
          %s175 = scalar_lea.hbm %s0, %s174
          %s176 = smul.u32 %s166, 4
          %s177 = sshll.u32 %s176, 4
          %s178 = sshll.u32 %s162, 4
          %s179 = int_to_ptr.vmem [resolvable:$true] %s178
          %181 = dma.hbm_to_vmem [thread:$0]  (%p171), %s175, %s177, %s179, %s159
        $region20: #{tpu_custom_call.1} parent=15 // pred_fallthru
          _
        // Predicated region
        $region21: #{tpu_custom_call.1} parent=15 // pred_check
          %p182 = pneg %p78
        $region22: #{tpu_custom_call.1} parent=15 // pred_check_branch
          %184 = sbr.rel (%p182) target = $region24
        $region23: #{tpu_custom_call.1} parent=15 // pred_region
          %s185 = sand.u32 %s68, 1
          %s186 = scalar_lea.sflag [#allocation5], %s185
          %s187 = sand.u32 %s68, 1
          %s188 = smul.addr %s187, 2
          %s189 = scalar_lea.vmem [#allocation4], %s188
          %s190 = smul.u32 2, %s24
          %s191 = ssub.s32 3, %s190
          %p192 = scmp.lt.s32.totalorder %s191, 2
          %s193 = scalar_select %p192, %s191, 2
          %s194 = smul.u32 16, %s193
          %s196 = ssub.s32 32, %s194
          %197 = vsyncadd %s186, %s196
          %p198 = scmp.ne.s32.totalorder 0, %s194
          %s199 = smul.addr %s23, 3
          %s200 = sadd.s32 %s190, %s199
          %s201 = smul.addr %s200, 16
          %s202 = scalar_lea.hbm %s1, %s201
          %s203 = sshll.u32 %s193, 4
          %s204 = sshll.u32 %s189, 4
          %s205 = int_to_ptr.vmem [resolvable:$true] %s204
          %207 = dma.hbm_to_vmem [thread:$0]  (%p198), %s202, %s203, %s205, %s186
        $region24: #{tpu_custom_call.1} parent=15 // pred_fallthru
          _
      $region16: #{tpu_custom_call.1} parent=5 // pred_fallthru
        _
      %p208 = scmp.le.s32.totalorder 1, %s16
      %p209 = scmp.lt.s32.totalorder %s16, 5
      %p210 = pnand %p208, %p209
      %p211 = pneg %p210
      // Predicated region
      $region25: #{tpu_custom_call.1} parent=5 // pred_check
        _
      $region26: #{tpu_custom_call.1} parent=5 // pred_check_branch
        %213 = sbr.rel (%p210) target = $region28
      $region27: #{tpu_custom_call.1} parent=5 // pred_region
        %s214 = ssub.s32 %s16, 1
        %s215 = sand.u32 %s43, 1
        %s216 = scalar_lea.sflag [#allocation3], %s215
        %s217 = sand.u32 %s43, 1
        %s218 = smul.addr %s217, 8
        %s219 = scalar_lea.vmem [#allocation2], %s218
        // Predicated region
        $region29: #{tpu_custom_call.1} parent=27 // pred_check
          %p220 = pneg %p56
        $region30: #{tpu_custom_call.1} parent=27 // pred_check_branch
          %222 = sbr.rel (%p220) target = $region32
        $region31: #{tpu_custom_call.1} parent=27 // pred_region
          %223 = dma.done %s216, 128
        $region32: #{tpu_custom_call.1} parent=27 // pred_fallthru
          _
        %s224 = sand.u32 %s71, 1
        %s225 = scalar_lea.sflag [#allocation5], %s224
        %s226 = sand.u32 %s71, 1
        %s227 = smul.addr %s226, 2
        %s228 = scalar_lea.vmem [#allocation4], %s227
        // Predicated region
        $region33: #{tpu_custom_call.1} parent=27 // pred_check
          %p229 = pneg %p84
        $region34: #{tpu_custom_call.1} parent=27 // pred_check_branch
          %231 = sbr.rel (%p229) target = $region36
        $region35: #{tpu_custom_call.1} parent=27 // pred_region
          %232 = dma.done %s225, 32
        $region36: #{tpu_custom_call.1} parent=27 // pred_fallthru
          _
        %s233 = sand.u32 %s43, 1
        %s234 = scalar_lea.sflag [#allocation3], %s233
        %s235 = sand.u32 %s43, 1
        %s236 = smul.addr %s235, 8
        %s237 = scalar_lea.vmem [#allocation2], %s236
        %p238 = pneg %p56
        %p239 = pneg %p53
        %s240 = sand.u32 %s71, 1
        %s241 = scalar_lea.sflag [#allocation5], %s240
        %s242 = sand.u32 %s71, 1
        %s243 = smul.addr %s242, 2
        %s244 = scalar_lea.vmem [#allocation4], %s243
        %p245 = pneg %p84
        %p246 = pneg %p81
        %p247 = pneg %p110
        %p248 = pneg %p107
        %p249 = scmp.lt.s32.totalorder %s25, 1
        %s250 = scalar_select %p249, %s25, 1
        %s251 = smul.addr %s250, 4
        %s252 = scalar_lea.vmem %s2, %s251
        %p253 = pneg %p136
        %p254 = pneg %p133
        %p255 = scmp.lt.s32.totalorder %s25, 1
        %s256 = scalar_select %p255, %s25, 1
        %s257 = smul.addr %s256, 4
        %s258 = scalar_lea.vmem %s3, %s257
        %s259 = smul.u32 2, %s26
        %s260 = ssub.s32 3, %s259
        %p261 = scmp.lt.s32.totalorder %s260, 2
        %s262 = scalar_select %p261, %s260, 2
        %s263 = smul.u32 64, %s262
        %s264 = smul.u32 2, %s26
        %s265 = ssub.s32 3, %s264
        %p266 = scmp.lt.s32.totalorder %s265, 2
        %s267 = scalar_select %p266, %s265, 2
        %s268 = smul.u32 16, %s267
        %p269 = scmp.lt.s32.totalorder %s25, 1
        %s270 = scalar_select %p269, %s25, 1
        %s271 = smul.addr %s270, 4
        %s272 = scalar_lea.vmem %s2, %s271
        %p273 = scmp.lt.s32.totalorder %s25, 1
        %s274 = scalar_select %p273, %s25, 1
        %s275 = smul.addr %s274, 4
        %s276 = scalar_lea.vmem %s3, %s275
        %p277 = scmp.eq.s32.totalorder %s26, 0
        // Predicated region
        $region37: #{tpu_custom_call.1} parent=27 // pred_check
          %p278 = pneg %p277
        $region38: #{tpu_custom_call.1} parent=27 // pred_check_branch
          %280 = sbr.rel (%p278) target = $region40
        $region39: #{tpu_custom_call.1} parent=27 // pred_region
          %vm281 = vcmask 3072
          %282 = vst.msk [vmem:[%s272] sm:$0xf] %vm281, 0.0
          %283 = vst.msk [vmem:[%s276] sm:$0xf] %vm281, 0.0
        $region40: #{tpu_custom_call.1} parent=27 // pred_fallthru
          _
        %v284 = vld [vmem:[%s219] sm:$0xff]
        %v285 = vld [vmem:[%s228] sm:$0x3]
        %v286 = vlaneseq
        %v287 = vshrl.u32 %v286, 7
        %v288 = vlaneseq
        %v289 = vshrl.u32 %v288, 7
        %v290 = vsub.s32 0, %v289
        %v291 = vrot.slane %v285, %v290
        %v292 = vlaneseq
        %v293 = vshrl.u32 %v292, 7
        %v294 = vsub.s32 1, %v293
        %v295 = vrot.slane %v285, %v294
        %vm296 = vcmp.eq.s32.totalorder %v291, %v287
        %vm297 = vcmp.eq.s32.totalorder %v295, %v287
        %v298 = vsel %vm296, 1, 0
        %v299 = vsel %vm297, 1, 0
        %v300 = vcvt.s32.f32 %v298
        %v301 = vcvt.s32.f32 %v299
        %v302 = vlaneseq
        %v303 = vand.u32 %v302, 127
        %v304 = vadd.s32 %v303, 128
        %s305 = smul.u32 %s26, 256
        %v306 = vstv %s305
        %v307 = vadd.s32 %v306, %v303
        %v308 = vadd.s32 %v306, %v304
        %vm309 = vcmp.lt.s32.totalorder %v307, 320
        %vm310 = vcmp.lt.s32.totalorder %v308, 320
        %v311 = vsel %vm309, 1, 0
        %v312 = vsel %vm310, 1, 0
        %vm313 = vcmp.eq.s32.totalorder %v311, 1
        %vm314 = vcmp.eq.s32.totalorder %v312, 1
        %v316 = vcombine.high %v284, %v284
        %v318 = vsel %vm313, %v284, 0.0
        %v319 = vsel %vm314, %v316, 0.0
        %v320 = vsel %vm313, %v300, 0.0
        %v321 = vsel %vm314, %v301, 0.0
        %v322 = vld [vmem:[%s272] sm:$0xf]
        %v323 = vmul.f32 %v318, %v320
        %v324 = vmul.f32 %v319, %v321
        %vm325 = vcmask 1043456
        %v326 = vsel %vm325, %v323, 0.0
        %v327 = vsel %vm325, %v324, 0.0
        %v328 = vadd.f32 %v326, %v327
        %329 = vadd.xlane.f32.xlu0 %v328
        %v330 = vpop.xlane.xlu0 %329
        %v331 = vadd.f32 %v322, %v330
        %vm332 = vcmask 3072
        %333 = vst.msk [vmem:[%s272] sm:$0xf] %vm332, %v331
        %v334 = vld [vmem:[%s276] sm:$0xf]
        %v335 = vsel %vm325, %v318, 0.0
        %v336 = vsel %vm325, %v319, 0.0
        %v337 = vadd.f32 %v335, %v336
        %338 = vadd.xlane.f32.xlu0 %v337
        %v339 = vpop.xlane.xlu0 %338
        %v340 = vsel %vm325, %v320, 0.0
        %v341 = vsel %vm325, %v321, 0.0
        %v342 = vadd.f32 %v340, %v341
        %343 = vadd.xlane.f32.xlu0 %v342
        %v344 = vpop.xlane.xlu0 %343
        %v345 = vadd.f32 %v339, %v344
        %v346 = vadd.f32 %v334, %v345
        %347 = vst.msk [vmem:[%s276] sm:$0xf] %vm332, %v346
        %p348 = scmp.lt.s32.totalorder %s25, 1
        %s349 = scalar_select %p348, %s25, 1
        %s350 = smul.addr %s349, 4
        %s351 = scalar_lea.vmem %s2, %s350
        %p352 = scmp.lt.s32.totalorder %s25, 1
        %s353 = scalar_select %p352, %s25, 1
        %s354 = smul.addr %s353, 4
        %s355 = scalar_lea.vmem %s3, %s354
        // Predicated region
        $region41: #{tpu_custom_call.1} parent=27 // pred_check
          %p356 = pneg %p107
        $region42: #{tpu_custom_call.1} parent=27 // pred_check_branch
          %358 = sbr.rel (%p356) target = $region44
        $region43: #{tpu_custom_call.1} parent=27 // pred_region
          _
        $region44: #{tpu_custom_call.1} parent=27 // pred_fallthru
          _
        // Predicated region
        $region45: #{tpu_custom_call.1} parent=27 // pred_check
          %p359 = pneg %p133
        $region46: #{tpu_custom_call.1} parent=27 // pred_check_branch
          %361 = sbr.rel (%p359) target = $region48
        $region47: #{tpu_custom_call.1} parent=27 // pred_region
          _
        $region48: #{tpu_custom_call.1} parent=27 // pred_fallthru
          _
      $region28: #{tpu_custom_call.1} parent=5 // pred_fallthru
        _
      %p362 = scmp.le.s32.totalorder 2, %s16
      // Predicated region
      $region49: #{tpu_custom_call.1} parent=5 // pred_check
        %p363 = pneg %p362
      $region50: #{tpu_custom_call.1} parent=5 // pred_check_branch
        %365 = sbr.rel (%p363) target = $region52
      $region51: #{tpu_custom_call.1} parent=5 // pred_region
        %s366 = ssub.s32 %s16, 2
        // Predicated region
        $region53: #{tpu_custom_call.1} parent=51 // pred_check
          %p367 = pneg %p113
        $region54: #{tpu_custom_call.1} parent=51 // pred_check_branch
          %369 = sbr.rel (%p367) target = $region56
        $region55: #{tpu_custom_call.1} parent=51 // pred_region
          %p370 = scmp.lt.s32.totalorder %s27, 1
          %s371 = scalar_select %p370, %s27, 1
          %s372 = smul.addr %s371, 4
          %s373 = scalar_lea.vmem %s2, %s372
        $region56: #{tpu_custom_call.1} parent=51 // pred_fallthru
          _
        // Predicated region
        $region57: #{tpu_custom_call.1} parent=51 // pred_check
          %p374 = pneg %p139
        $region58: #{tpu_custom_call.1} parent=51 // pred_check_branch
          %376 = sbr.rel (%p374) target = $region60
        $region59: #{tpu_custom_call.1} parent=51 // pred_region
          %p377 = scmp.lt.s32.totalorder %s27, 1
          %s378 = scalar_select %p377, %s27, 1
          %s379 = smul.addr %s378, 4
          %s380 = scalar_lea.vmem %s3, %s379
        $region60: #{tpu_custom_call.1} parent=51 // pred_fallthru
          _
      $region52: #{tpu_custom_call.1} parent=5 // pred_fallthru
        _
    $region6: #{tpu_custom_call.1} parent=1 // loop_footer
      %s20 = sadd.s32 1, %s16
    $region7: #{tpu_custom_call.1} parent=1 // loop_footer_branch
      %15 = sbr.rel target = $region3
    $region8: #{tpu_custom_call.1} parent=1 // loop_exit
      _
    %381 = vsyncpa [#allocation3], 1
    %s382 = scalar_lea.sflag [#allocation3], 1
    %383 = vsyncpa %s382, 1
    %384 = vsyncpa [#allocation5], 1
    %s385 = scalar_lea.sflag [#allocation5], 1
    %386 = vsyncpa %s385, 1

</llo_original>
